<compile_context>
chip_gen: v6e
topology: v6e:2x2x1
jax: 0.10.0
libtpu: 0.0.40
codegen_flags: <defaults>
</compile_context>

<pallas_src>
import functools

import jax
import jax.numpy as jnp
from jax.experimental import pallas as pl
from jax.experimental.pallas import tpu as pltpu

K = 3          # Conv1d kernel size (padding=1, "same" length)
LN_EPS = 1e-5  # PyTorch LayerNorm default eps
LANE = 128


def _round_up(x, m):
    return (x + m - 1) // m * m


def _pick_tile_n(n, l, max_rows=2048, min_grid=2):
    """Choose (tile_n, padded_n).

    Per-step pipeline overhead is ~0.35us, so prefer few, big steps; but keep
    the flattened row count (tile_n * l) within `max_rows` (VMEM budget;
    raise max_rows on v6e's 128 MiB VMEM, keep/lower it on v7x/v5e) and keep
    at least `min_grid` grid steps when possible so v7x's two TensorCores
    both get work via dimension_semantics=("parallel",).
    tile_n is either == n (small batch) or a multiple of 8 (sublane tiling of
    the (tile_n, 128) output block); n is padded up to a multiple of tile_n.
    """
    if n <= 8:
        return n, n
    # Largest multiple-of-8 tile within the row budget (clamped to >= 8 so a
    # huge l degrades gracefully instead of failing; vmem_limit gives slack).
    cap = max(8, min(max_rows // max(l, 1), n) // 8 * 8)
    tile = cap
    while tile > 8 and -(-n // tile) < min_grid:
        tile -= 8
    n_pad = -(-n // tile) * tile
    return tile, n_pad


def _single_head_kernel(x_ref, mprev_ref, mnext_ref,
                        w1p_ref, w1c_ref, w1n_ref, b1_ref,
                        w2_ref, b2_ref, wh_ref, bh_ref, o_ref,
                        *, seq_len, tile_n):
    """One batch tile per grid step: LN -> (Conv1d+ReLU) x2 -> GAP -> Linear."""
    L = seq_len
    R = tile_n * L
    x = x_ref[...].astype(jnp.float32)                         # (R, C)

    # ---- input LayerNorm over the channel (lane) axis, no affine ----
    mu = jnp.mean(x, axis=-1, keepdims=True)
    var = jnp.mean((x - mu) ** 2, axis=-1, keepdims=True)
    h = (x - mu) * jax.lax.rsqrt(var + LN_EPS)

    # Precomputed boundary masks for the "same"-padded conv taps (constant
    # across grid steps; DMA'd once, VMEM resident).  The wrap-around rows of
    # the rolls are exactly the rows the masks zero (== conv zero padding), so
    # shifts never leak across batch elements inside the tile.
    m_prev = mprev_ref[...]                                    # (R, 1) f32
    m_next = mnext_ref[...]                                    # (R, 1) f32

    cd = w2_ref.dtype                                          # MXU input dtype

    # ---- conv layer 1 (tiny Cin): three accumulated dots, no lane-concat ----
    h_prev = pltpu.roll(h, shift=1, axis=0) * m_prev           # x[l-1]
    h_next = pltpu.roll(h, shift=R - 1, axis=0) * m_next       # x[l+1]
    y = (jnp.dot(h_prev.astype(cd), w1p_ref[...], preferred_element_type=jnp.float32)
         + jnp.dot(h.astype(cd), w1c_ref[...], preferred_element_type=jnp.float32)
         + jnp.dot(h_next.astype(cd), w1n_ref[...], preferred_element_type=jnp.float32))
    h = jnp.maximum(y + b1_ref[...], 0.0)                      # (R, D)

    # ---- conv layer 2: taps stacked at true width (3*D <= 128) -> one matmul ----
    h_prev = pltpu.roll(h, shift=1, axis=0) * m_prev
    h_next = pltpu.roll(h, shift=R - 1, axis=0) * m_next
    h_cat = jnp.concatenate([h_prev, h, h_next], axis=-1)      # (R, 3*D)
    y = jnp.dot(h_cat.astype(cd), w2_ref[...], preferred_element_type=jnp.float32)
    h = jnp.maximum(y + b2_ref[...], 0.0)                      # (R, D)

    # ---- GAP: layout-clean reshape + sublane sum (1/L folded into head W) ----
    feat = jnp.sum(h.reshape(tile_n, L, h.shape[-1]), axis=1)  # (tile_n, D)

    # ---- linear head (output lanes padded to 128 -> dense multi-row store) ----
    out = jnp.dot(feat.astype(cd), wh_ref[...], preferred_element_type=jnp.float32)
    o_ref[...] = (out + bh_ref[...]).astype(o_ref.dtype)       # (tile_n, NOp)


def _prep_params(params, seq_len, compute_dtype):
    """Split conv1 taps, stack conv2 taps at true width, pad head output lanes,
    and fold the GAP 1/L scale into the head weight."""
    w1, b1, w2, b2, wh, bh = params
    C, D = w1.shape[1], w1.shape[2]
    n_out = wh.shape[1]
    NOp = _round_up(n_out, LANE)

    w1_taps = tuple(w1[k].astype(compute_dtype) for k in range(K))   # 3 x (C, D)
    w2s = w2.reshape(K * D, D).astype(compute_dtype)                 # (3*D, D)
    b1p = jnp.reshape(b1, (1, D)).astype(jnp.float32)                # biases stay f32
    b2p = jnp.reshape(b2, (1, D)).astype(jnp.float32)
    whp = (jnp.pad(wh, ((0, 0), (0, NOp - n_out)))
           * (1.0 / seq_len)).astype(compute_dtype)                  # (D, NOp)
    bhp = jnp.pad(jnp.reshape(bh, (1, n_out)),
                  ((0, 0), (0, NOp - n_out))).astype(jnp.float32)    # (1, NOp)
    return (w1_taps, b1p, w2s, b2p, whp, bhp), C, D, n_out, NOp


def single_head_model_forward(x, params, *, compute_dtype=jnp.bfloat16,
                              max_rows=2048):
    """x: (N, L, C) float32. Returns logits (N, n_base_nodes).

    compute_dtype controls the MXU input dtype (accumulation is always f32).
    bf16 is the default on all generations (v5e's MXU is natively bf16 and all
    elementwise work stays f32); pass jnp.float32 for tighter numerics, at
    ~3x MXU cost.  Raise max_rows (e.g. 4096-8192) on v6e for bigger tiles.
    """
    N, L, C = x.shape
    (w1_taps, b1p, w2s, b2p, whp, bhp), C_, D, n_out, NOp = _prep_params(
        params, L, compute_dtype)
    assert C_ == C
    # TODO(synk): support seq_len not a multiple of 8 (the in-kernel GAP
    # reshape assumes a layout-clean sublane split).
    assert L % 8 == 0, "seq_len must be a multiple of 8"

    tile_n, n_pad = _pick_tile_n(N, L, max_rows=max_rows)
    if n_pad != N:
        x = jnp.pad(x, ((0, n_pad - N), (0, 0), (0, 0)))
    grid = (n_pad // tile_n,)
    rows = tile_n * L
    xf = x.reshape(n_pad * L, C).astype(jnp.float32)           # flatten batch+seq

    # Static boundary masks (same for every grid step: tiles are L-aligned).
    l_idx = jnp.arange(rows, dtype=jnp.int32) % L
    m_prev = (l_idx > 0).astype(jnp.float32)[:, None]          # x[l-1] valid
    m_next = (l_idx < L - 1).astype(jnp.float32)[:, None]      # x[l+1] valid

    flops = (2 * n_pad * L * (K * C * D + K * D * D)           # conv1 + conv2
             + n_pad * L * D                                   # GAP sum
             + 2 * n_pad * D * NOp)                            # head
    const_in = (w1_taps[0], w1_taps[1], w1_taps[2], w2s, whp,
                b1p, b2p, bhp, m_prev, m_next)
    bytes_accessed = (xf.size * 4 + n_pad * NOp * 4
                      + sum(int(a.size) * a.dtype.itemsize for a in const_in))

    kernel = functools.partial(_single_head_kernel, seq_len=L, tile_n=tile_n)
    out = pl.pallas_call(
        kernel,
        out_shape=jax.ShapeDtypeStruct((n_pad, NOp), jnp.float32),
        grid=grid,
        in_specs=[
            pl.BlockSpec((rows, C), lambda i: (i, 0)),         # batch-tile rows
            pl.BlockSpec((rows, 1), lambda i: (0, 0)),         # prev-tap mask
            pl.BlockSpec((rows, 1), lambda i: (0, 0)),         # next-tap mask
            pl.BlockSpec((C, D), lambda i: (0, 0)),            # conv1 tap x[l-1]
            pl.BlockSpec((C, D), lambda i: (0, 0)),            # conv1 tap x[l]
            pl.BlockSpec((C, D), lambda i: (0, 0)),            # conv1 tap x[l+1]
            pl.BlockSpec((1, D), lambda i: (0, 0)),            # conv1 bias
            pl.BlockSpec((K * D, D), lambda i: (0, 0)),        # conv2 stacked W
            pl.BlockSpec((1, D), lambda i: (0, 0)),            # conv2 bias
            pl.BlockSpec((D, NOp), lambda i: (0, 0)),          # head W (x 1/L)
            pl.BlockSpec((1, NOp), lambda i: (0, 0)),          # head bias
        ],
        out_specs=pl.BlockSpec((tile_n, NOp), lambda i: (i, 0)),
        compiler_params=pltpu.CompilerParams(
            dimension_semantics=("parallel",),
            # Explicit scoped-VMEM limit: generous vs the few-MiB per-step live
            # set, but with headroom under v7x's 64 MiB physical VMEM.
            vmem_limit_bytes=48 * 1024 * 1024),
        cost_estimate=pl.CostEstimate(
            flops=int(flops), transcendentals=int(n_pad * L),
            bytes_accessed=int(bytes_accessed)),
    )(xf, m_prev, m_next, *w1_taps, b1p, w2s, b2p, whp, bhp)
    return out[:N, :n_out].astype(x.dtype)


def reference_forward(x, params):
    """Pure-JAX reference with identical semantics (for correctness check)."""
    w1, b1, w2, b2, wh, bh = params
    mu = jnp.mean(x, axis=-1, keepdims=True)
    var = jnp.mean((x - mu) ** 2, axis=-1, keepdims=True)
    h = (x - mu) / jnp.sqrt(var + LN_EPS)

    def conv_relu(h_in, w, b):
        L = h_in.shape[1]
        hp = jnp.pad(h_in, ((0, 0), (1, 1), (0, 0)))
        acc = sum(jnp.einsum('nlc,cd->nld', hp[:, k:k + L], w[k])
                  for k in range(K)) + b
        return jnp.maximum(acc, 0.0)

    h = conv_relu(h, w1, b1)
    h = conv_relu(h, w2, b2)
    feat = jnp.mean(h, axis=1)
    return feat @ wh + bh


if __name__ == "__main__":
    # Small shapes consistent with the module:
    #   batch N=2, input_channels C=4, seq_len L=16,
    #   feature_dims D=32, n_layers=2 (conv layers), n_base_nodes=8
    N, L, C, D, n_out = 2, 16, 4, 32, 8

    key = jax.random.PRNGKey(0)
    kx, k1, k2, k3, k4, k5, k6 = jax.random.split(key, 7)

    x = jax.random.normal(kx, (N, L, C), jnp.float32)

    # PyTorch conv weight (Cout, Cin, K) is stored here as (K, Cin, Cout),
    # head weight (n_out, D) is stored as (D, n_out).
    w1 = 0.2 * jax.random.normal(k1, (K, C, D), jnp.float32)
    b1 = 0.1 * jax.random.normal(k2, (1, D), jnp.float32)
    w2 = 0.2 * jax.random.normal(k3, (K, D, D), jnp.float32)
    b2 = 0.1 * jax.random.normal(k4, (1, D), jnp.float32)
    wh = 0.2 * jax.random.normal(k5, (D, n_out), jnp.float32)
    bh = 0.1 * jax.random.normal(k6, (1, n_out), jnp.float32)
    params = (w1, b1, w2, b2, wh, bh)

    ref = reference_forward(x, params)

    # f32 MXU-input path (tight numerics).
    out_f32 = jax.block_until_ready(
        single_head_model_forward(x, params, compute_dtype=jnp.float32))
    assert out_f32.shape == (N, n_out)
    assert jnp.allclose(out_f32, ref, atol=1e-4, rtol=1e-4), (out_f32, ref)

    # Default bf16 MXU-input path with f32 accumulation (all generations).
    out_bf16 = jax.block_until_ready(single_head_model_forward(x, params))
    assert out_bf16.shape == (N, n_out)
    assert jnp.allclose(out_bf16, ref, atol=5e-2, rtol=5e-2), (out_bf16, ref)

    print("KERNEL_OK")
</pallas_src>

<mosaic_0001>
module attributes {stable_mosaic.version = 11 : i64} {
  func.func @_single_head_kernel(%arg0: i32, %arg1: memref<32x4xf32, #tpu.memory_space<vmem>>, %arg2: memref<32x1xf32, #tpu.memory_space<vmem>>, %arg3: memref<32x1xf32, #tpu.memory_space<vmem>>, %arg4: memref<4x32xf32, #tpu.memory_space<vmem>>, %arg5: memref<4x32xf32, #tpu.memory_space<vmem>>, %arg6: memref<4x32xf32, #tpu.memory_space<vmem>>, %arg7: memref<1x32xf32, #tpu.memory_space<vmem>>, %arg8: memref<96x32xf32, #tpu.memory_space<vmem>>, %arg9: memref<1x32xf32, #tpu.memory_space<vmem>>, %arg10: memref<32x128xf32, #tpu.memory_space<vmem>>, %arg11: memref<1x128xf32, #tpu.memory_space<vmem>>, %arg12: memref<2x128xf32, #tpu.memory_space<vmem>>) attributes {dimension_semantics = [#tpu.dimension_semantics<parallel>], iteration_bounds = array<i64: 1>, scalar_prefetch = 0 : i64, scratch_operands = 0 : i64, tpu.core_type = #tpu.core_type<tc>, window_params = [{transform_indices = @transform_0, window_bounds = array<i64: 32, 4>}, {pipeline_mode = #tpu.pipeline_mode<synchronous>, transform_indices = @transform_1, window_bounds = array<i64: 32, 1>}, {pipeline_mode = #tpu.pipeline_mode<synchronous>, transform_indices = @transform_2, window_bounds = array<i64: 32, 1>}, {pipeline_mode = #tpu.pipeline_mode<synchronous>, transform_indices = @transform_3, window_bounds = array<i64: 4, 32>}, {pipeline_mode = #tpu.pipeline_mode<synchronous>, transform_indices = @transform_4, window_bounds = array<i64: 4, 32>}, {pipeline_mode = #tpu.pipeline_mode<synchronous>, transform_indices = @transform_5, window_bounds = array<i64: 4, 32>}, {pipeline_mode = #tpu.pipeline_mode<synchronous>, transform_indices = @transform_6, window_bounds = array<i64: 1, 32>}, {pipeline_mode = #tpu.pipeline_mode<synchronous>, transform_indices = @transform_7, window_bounds = array<i64: 96, 32>}, {pipeline_mode = #tpu.pipeline_mode<synchronous>, transform_indices = @transform_8, window_bounds = array<i64: 1, 32>}, {pipeline_mode = #tpu.pipeline_mode<synchronous>, transform_indices = @transform_9, window_bounds = array<i64: 32, 128>}, {pipeline_mode = #tpu.pipeline_mode<synchronous>, transform_indices = @transform_10, window_bounds = array<i64: 1, 128>}, {transform_indices = @transform_11, window_bounds = array<i64: 2, 128>}]} {
    %c0 = arith.constant 0 : index
    %c0_0 = arith.constant 0 : index
    %0 = vector.load %arg1[%c0, %c0_0] : memref<32x4xf32, #tpu.memory_space<vmem>>, vector<32x4xf32>
    %cst = arith.constant dense<0.000000e+00> : vector<32xf32>
    %1 = vector.multi_reduction <add>, %0, %cst [1] : vector<32x4xf32> to vector<32xf32>
    %2 = vector.shape_cast %1 : vector<32xf32> to vector<32x1xf32>
    %cst_1 = arith.constant 4.000000e+00 : f32
    %3 = vector.broadcast %cst_1 : f32 to vector<32x1xf32>
    %4 = arith.divf %2, %3 : vector<32x1xf32>
    %5 = vector.broadcast %4 : vector<32x1xf32> to vector<32x4xf32>
    %6 = arith.subf %0, %5 : vector<32x4xf32>
    %7 = arith.mulf %6, %6 : vector<32x4xf32>
    %cst_2 = arith.constant dense<0.000000e+00> : vector<32xf32>
    %8 = vector.multi_reduction <add>, %7, %cst_2 [1] : vector<32x4xf32> to vector<32xf32>
    %9 = vector.shape_cast %8 : vector<32xf32> to vector<32x1xf32>
    %cst_3 = arith.constant 4.000000e+00 : f32
    %10 = vector.broadcast %cst_3 : f32 to vector<32x1xf32>
    %11 = arith.divf %9, %10 : vector<32x1xf32>
    %12 = vector.broadcast %4 : vector<32x1xf32> to vector<32x4xf32>
    %13 = arith.subf %0, %12 : vector<32x4xf32>
    %cst_4 = arith.constant 9.99999974E-6 : f32
    %14 = vector.broadcast %cst_4 : f32 to vector<32x1xf32>
    %15 = arith.addf %11, %14 : vector<32x1xf32>
    %16 = math.rsqrt %15 : vector<32x1xf32>
    %17 = vector.broadcast %16 : vector<32x1xf32> to vector<32x4xf32>
    %18 = arith.mulf %13, %17 : vector<32x4xf32>
    %c0_5 = arith.constant 0 : index
    %c0_6 = arith.constant 0 : index
    %19 = vector.load %arg2[%c0_5, %c0_6] : memref<32x1xf32, #tpu.memory_space<vmem>>, vector<32x1xf32>
    %c0_7 = arith.constant 0 : index
    %c0_8 = arith.constant 0 : index
    %20 = vector.load %arg3[%c0_7, %c0_8] : memref<32x1xf32, #tpu.memory_space<vmem>>, vector<32x1xf32>
    %c1_i32 = arith.constant 1 : i32
    %21 = tpu.dynamic_rotate %18 by %c1_i32 dim 0 : vector<32x4xf32>, i32 -> vector<32x4xf32>
    %22 = vector.broadcast %19 : vector<32x1xf32> to vector<32x4xf32>
    %23 = arith.mulf %21, %22 : vector<32x4xf32>
    %c31_i32 = arith.constant 31 : i32
    %24 = tpu.dynamic_rotate %18 by %c31_i32 dim 0 : vector<32x4xf32>, i32 -> vector<32x4xf32>
    %25 = vector.broadcast %20 : vector<32x1xf32> to vector<32x4xf32>
    %26 = arith.mulf %24, %25 : vector<32x4xf32>
    %c0_9 = arith.constant 0 : index
    %c0_10 = arith.constant 0 : index
    %27 = vector.load %arg4[%c0_9, %c0_10] : memref<4x32xf32, #tpu.memory_space<vmem>>, vector<4x32xf32>
    %cst_11 = arith.constant dense<0.000000e+00> : vector<32x32xf32>
    %28 = tpu.matmul %23, %27, %cst_11 {dimension_numbers = #tpu.dot_dimension_numbers<[1], [0], [0], [1], [0, 0, 1, 1], [], []>} : vector<32x4xf32>, vector<4x32xf32>, vector<32x32xf32> -> vector<32x32xf32>
    %c0_12 = arith.constant 0 : index
    %c0_13 = arith.constant 0 : index
    %29 = vector.load %arg5[%c0_12, %c0_13] : memref<4x32xf32, #tpu.memory_space<vmem>>, vector<4x32xf32>
    %cst_14 = arith.constant dense<0.000000e+00> : vector<32x32xf32>
    %30 = tpu.matmul %18, %29, %cst_14 {dimension_numbers = #tpu.dot_dimension_numbers<[1], [0], [0], [1], [0, 0, 1, 1], [], []>} : vector<32x4xf32>, vector<4x32xf32>, vector<32x32xf32> -> vector<32x32xf32>
    %31 = arith.addf %28, %30 : vector<32x32xf32>
    %c0_15 = arith.constant 0 : index
    %c0_16 = arith.constant 0 : index
    %32 = vector.load %arg6[%c0_15, %c0_16] : memref<4x32xf32, #tpu.memory_space<vmem>>, vector<4x32xf32>
    %cst_17 = arith.constant dense<0.000000e+00> : vector<32x32xf32>
    %33 = tpu.matmul %26, %32, %cst_17 {dimension_numbers = #tpu.dot_dimension_numbers<[1], [0], [0], [1], [0, 0, 1, 1], [], []>} : vector<32x4xf32>, vector<4x32xf32>, vector<32x32xf32> -> vector<32x32xf32>
    %34 = arith.addf %31, %33 : vector<32x32xf32>
    %c0_18 = arith.constant 0 : index
    %c0_19 = arith.constant 0 : index
    %35 = vector.load %arg7[%c0_18, %c0_19] : memref<1x32xf32, #tpu.memory_space<vmem>>, vector<1x32xf32>
    %36 = vector.broadcast %35 : vector<1x32xf32> to vector<32x32xf32>
    %37 = arith.addf %34, %36 : vector<32x32xf32>
    %cst_20 = arith.constant 0.000000e+00 : f32
    %38 = vector.broadcast %cst_20 : f32 to vector<32x32xf32>
    %39 = arith.maximumf %37, %38 : vector<32x32xf32>
    %c1_i32_21 = arith.constant 1 : i32
    %40 = tpu.dynamic_rotate %39 by %c1_i32_21 dim 0 : vector<32x32xf32>, i32 -> vector<32x32xf32>
    %41 = vector.broadcast %19 : vector<32x1xf32> to vector<32x32xf32>
    %42 = arith.mulf %40, %41 : vector<32x32xf32>
    %c31_i32_22 = arith.constant 31 : i32
    %43 = tpu.dynamic_rotate %39 by %c31_i32_22 dim 0 : vector<32x32xf32>, i32 -> vector<32x32xf32>
    %44 = vector.broadcast %20 : vector<32x1xf32> to vector<32x32xf32>
    %45 = arith.mulf %43, %44 : vector<32x32xf32>
    %46 = tpu.concatenate %42, %39, %45 in 1 : vector<32x32xf32>, vector<32x32xf32>, vector<32x32xf32> -> vector<32x96xf32>
    %c0_23 = arith.constant 0 : index
    %c0_24 = arith.constant 0 : index
    %47 = vector.load %arg8[%c0_23, %c0_24] : memref<96x32xf32, #tpu.memory_space<vmem>>, vector<96x32xf32>
    %cst_25 = arith.constant dense<0.000000e+00> : vector<32x32xf32>
    %48 = tpu.matmul %46, %47, %cst_25 {dimension_numbers = #tpu.dot_dimension_numbers<[1], [0], [0], [1], [0, 0, 1, 1], [], []>} : vector<32x96xf32>, vector<96x32xf32>, vector<32x32xf32> -> vector<32x32xf32>
    %c0_26 = arith.constant 0 : index
    %c0_27 = arith.constant 0 : index
    %49 = vector.load %arg9[%c0_26, %c0_27] : memref<1x32xf32, #tpu.memory_space<vmem>>, vector<1x32xf32>
    %50 = vector.broadcast %49 : vector<1x32xf32> to vector<32x32xf32>
    %51 = arith.addf %48, %50 : vector<32x32xf32>
    %cst_28 = arith.constant 0.000000e+00 : f32
    %52 = vector.broadcast %cst_28 : f32 to vector<32x32xf32>
    %53 = arith.maximumf %51, %52 : vector<32x32xf32>
    %54 = vector.shape_cast %53 : vector<32x32xf32> to vector<2x16x32xf32>
    %cst_29 = arith.constant dense<0.000000e+00> : vector<2x32xf32>
    %55 = vector.multi_reduction <add>, %54, %cst_29 [1] : vector<2x16x32xf32> to vector<2x32xf32>
    %c0_30 = arith.constant 0 : index
    %c0_31 = arith.constant 0 : index
    %56 = vector.load %arg10[%c0_30, %c0_31] : memref<32x128xf32, #tpu.memory_space<vmem>>, vector<32x128xf32>
    %cst_32 = arith.constant dense<0.000000e+00> : vector<2x128xf32>
    %57 = tpu.matmul %55, %56, %cst_32 {dimension_numbers = #tpu.dot_dimension_numbers<[1], [0], [0], [1], [0, 0, 1, 1], [], []>} : vector<2x32xf32>, vector<32x128xf32>, vector<2x128xf32> -> vector<2x128xf32>
    %c0_33 = arith.constant 0 : index
    %c0_34 = arith.constant 0 : index
    %58 = vector.load %arg11[%c0_33, %c0_34] : memref<1x128xf32, #tpu.memory_space<vmem>>, vector<1x128xf32>
    %59 = vector.broadcast %58 : vector<1x128xf32> to vector<2x128xf32>
    %60 = arith.addf %57, %59 : vector<2x128xf32>
    %c0_35 = arith.constant 0 : index
    %c0_36 = arith.constant 0 : index
    %61 = vector.load %arg12[%c0_35, %c0_36] : memref<2x128xf32, #tpu.memory_space<vmem>>, vector<2x128xf32>
    tpu.vector_store %arg12[%c0_35, %c0_36], %60 {strides = array<i32>} : memref<2x128xf32, #tpu.memory_space<vmem>>, vector<2x128xf32>,
    return
  }
  func.func @transform_0(%arg0: i32) -> (i32, i32) {
    %c0_i32 = arith.constant 0 : i32
    %c0_i32_0 = arith.constant 0 : i32
    return %arg0, %c0_i32 : i32, i32
  }
  func.func @transform_1(%arg0: i32) -> (i32, i32) {
    %c0_i32 = arith.constant 0 : i32
    %c0_i32_0 = arith.constant 0 : i32
    %c0_i32_1 = arith.constant 0 : i32
    return %c0_i32, %c0_i32_0 : i32, i32
  }
  func.func @transform_2(%arg0: i32) -> (i32, i32) {
    %c0_i32 = arith.constant 0 : i32
    %c0_i32_0 = arith.constant 0 : i32
    %c0_i32_1 = arith.constant 0 : i32
    return %c0_i32, %c0_i32_0 : i32, i32
  }
  func.func @transform_3(%arg0: i32) -> (i32, i32) {
    %c0_i32 = arith.constant 0 : i32
    %c0_i32_0 = arith.constant 0 : i32
    %c0_i32_1 = arith.constant 0 : i32
    return %c0_i32, %c0_i32_0 : i32, i32
  }
  func.func @transform_4(%arg0: i32) -> (i32, i32) {
    %c0_i32 = arith.constant 0 : i32
    %c0_i32_0 = arith.constant 0 : i32
    %c0_i32_1 = arith.constant 0 : i32
    return %c0_i32, %c0_i32_0 : i32, i32
  }
  func.func @transform_5(%arg0: i32) -> (i32, i32) {
    %c0_i32 = arith.constant 0 : i32
    %c0_i32_0 = arith.constant 0 : i32
    %c0_i32_1 = arith.constant 0 : i32
    return %c0_i32, %c0_i32_0 : i32, i32
  }
  func.func @transform_6(%arg0: i32) -> (i32, i32) {
    %c0_i32 = arith.constant 0 : i32
    %c0_i32_0 = arith.constant 0 : i32
    %c0_i32_1 = arith.constant 0 : i32
    return %c0_i32, %c0_i32_0 : i32, i32
  }
  func.func @transform_7(%arg0: i32) -> (i32, i32) {
    %c0_i32 = arith.constant 0 : i32
    %c0_i32_0 = arith.constant 0 : i32
    %c0_i32_1 = arith.constant 0 : i32
    return %c0_i32, %c0_i32_0 : i32, i32
  }
  func.func @transform_8(%arg0: i32) -> (i32, i32) {
    %c0_i32 = arith.constant 0 : i32
    %c0_i32_0 = arith.constant 0 : i32
    %c0_i32_1 = arith.constant 0 : i32
    return %c0_i32, %c0_i32_0 : i32, i32
  }
  func.func @transform_9(%arg0: i32) -> (i32, i32) {
    %c0_i32 = arith.constant 0 : i32
    %c0_i32_0 = arith.constant 0 : i32
    %c0_i32_1 = arith.constant 0 : i32
    return %c0_i32, %c0_i32_0 : i32, i32
  }
  func.func @transform_10(%arg0: i32) -> (i32, i32) {
    %c0_i32 = arith.constant 0 : i32
    %c0_i32_0 = arith.constant 0 : i32
    %c0_i32_1 = arith.constant 0 : i32
    return %c0_i32, %c0_i32_0 : i32, i32
  }
  func.func @transform_11(%arg0: i32) -> (i32, i32) {
    %c0_i32 = arith.constant 0 : i32
    %c0_i32_0 = arith.constant 0 : i32
    return %arg0, %c0_i32 : i32, i32
  }
}

</mosaic_0001>

<llo_original>
// kernel: tpu_custom_call.1
$region0: #{tpu_custom_call.1}
  #allocation0 [shape = 'u32[]', space=smem, size = 0x4, offset = 0x4, fixed_abs, tag = 'smem constant byte address 0x4 - core index']
  #allocation1 [shape = 'u32[144,128]{1,0:T(1,128)}', space=vmem, size = 0x12000, scoped, tag = 'internal scratch']
  %s0 = inlined_call_operand.vmem [shape: f32[32,4], index: 0, kind: input, shape index: {}]
  %s1 = inlined_call_operand.vmem [shape: f32[32,1], index: 1, kind: input, shape index: {}]
  %s2 = inlined_call_operand.vmem [shape: f32[32,1], index: 2, kind: input, shape index: {}]
  %s3 = inlined_call_operand.vmem [shape: f32[4,32], index: 3, kind: input, shape index: {}]
  %s4 = inlined_call_operand.vmem [shape: f32[4,32], index: 4, kind: input, shape index: {}]
  %s5 = inlined_call_operand.vmem [shape: f32[4,32], index: 5, kind: input, shape index: {}]
  %s6 = inlined_call_operand.vmem [shape: f32[1,32], index: 6, kind: input, shape index: {}]
  %s7 = inlined_call_operand.vmem [shape: f32[96,32], index: 7, kind: input, shape index: {}]
  %s8 = inlined_call_operand.vmem [shape: f32[1,32], index: 8, kind: input, shape index: {}]
  %s9 = inlined_call_operand.vmem [shape: f32[32,128], index: 9, kind: input, shape index: {}]
  %s10 = inlined_call_operand.vmem [shape: f32[1,128], index: 10, kind: input, shape index: {}]
  %s11 = inlined_call_operand.hbm [shape: f32[2,128], index: 11, kind: output, shape index: {}]
  %s12 = sld [smem:[#allocation0]]
  $region54: #{tpu_custom_call.1} parent=0
    _
  %s14 = ssub.s32 1, %s12
  %s15 = scalar_select 0, %s14, %s12
  $region1: #{tpu_custom_call.1} parent=0
    #allocation2 [shape = 'u8[1024]{0}', space=vmem, size = 0x400, scoped, tag = 'output window, operand 0, single buffered']
    #allocation3 [shape = 's32[1]{0}', space=sflag, size = 0x4, scoped, tag = 'scoped memory for tpu_custom_call.1']
    %16 = vsyncpa [#allocation3], 0
    // Predicated region
    $region2: #{tpu_custom_call.1} parent=1 // pred_check
      _
    $region3: #{tpu_custom_call.1} parent=1 // pred_check_branch
      %18 = sbr.rel (0) target = $region5
    $region4: #{tpu_custom_call.1} parent=1 // pred_region
      _
    $region5: #{tpu_custom_call.1} parent=1 // pred_fallthru
      _
    // Predicated region
    $region6: #{tpu_custom_call.1} parent=1 // pred_check
      _
    $region7: #{tpu_custom_call.1} parent=1 // pred_check_branch
      %20 = sbr.rel (0) target = $region9
    $region8: #{tpu_custom_call.1} parent=1 // pred_region
      _
    $region9: #{tpu_custom_call.1} parent=1 // pred_fallthru
      _
    // Predicated region
    $region10: #{tpu_custom_call.1} parent=1 // pred_check
      _
    $region11: #{tpu_custom_call.1} parent=1 // pred_check_branch
      %22 = sbr.rel (0) target = $region13
    $region12: #{tpu_custom_call.1} parent=1 // pred_region
      _
    $region13: #{tpu_custom_call.1} parent=1 // pred_fallthru
      _
    // Predicated region
    $region14: #{tpu_custom_call.1} parent=1 // pred_check
      _
    $region15: #{tpu_custom_call.1} parent=1 // pred_check_branch
      %24 = sbr.rel (0) target = $region17
    $region16: #{tpu_custom_call.1} parent=1 // pred_region
      _
    $region17: #{tpu_custom_call.1} parent=1 // pred_fallthru
      _
    // Predicated region
    $region18: #{tpu_custom_call.1} parent=1 // pred_check
      _
    $region19: #{tpu_custom_call.1} parent=1 // pred_check_branch
      %26 = sbr.rel (0) target = $region21
    $region20: #{tpu_custom_call.1} parent=1 // pred_region
      _
    $region21: #{tpu_custom_call.1} parent=1 // pred_fallthru
      _
    // Predicated region
    $region22: #{tpu_custom_call.1} parent=1 // pred_check
      _
    $region23: #{tpu_custom_call.1} parent=1 // pred_check_branch
      %28 = sbr.rel (0) target = $region25
    $region24: #{tpu_custom_call.1} parent=1 // pred_region
      _
    $region25: #{tpu_custom_call.1} parent=1 // pred_fallthru
      _
    // Predicated region
    $region26: #{tpu_custom_call.1} parent=1 // pred_check
      _
    $region27: #{tpu_custom_call.1} parent=1 // pred_check_branch
      %30 = sbr.rel (0) target = $region29
    $region28: #{tpu_custom_call.1} parent=1 // pred_region
      _
    $region29: #{tpu_custom_call.1} parent=1 // pred_fallthru
      _
    // Predicated region
    $region30: #{tpu_custom_call.1} parent=1 // pred_check
      _
    $region31: #{tpu_custom_call.1} parent=1 // pred_check_branch
      %32 = sbr.rel (0) target = $region33
    $region32: #{tpu_custom_call.1} parent=1 // pred_region
      _
    $region33: #{tpu_custom_call.1} parent=1 // pred_fallthru
      _
    // Predicated region
    $region34: #{tpu_custom_call.1} parent=1 // pred_check
      _
    $region35: #{tpu_custom_call.1} parent=1 // pred_check_branch
      %34 = sbr.rel (0) target = $region37
    $region36: #{tpu_custom_call.1} parent=1 // pred_region
      _
    $region37: #{tpu_custom_call.1} parent=1 // pred_fallthru
      _
    // Predicated region
    $region38: #{tpu_custom_call.1} parent=1 // pred_check
      _
    $region39: #{tpu_custom_call.1} parent=1 // pred_check_branch
      %36 = sbr.rel (0) target = $region41
    $region40: #{tpu_custom_call.1} parent=1 // pred_region
      _
    $region41: #{tpu_custom_call.1} parent=1 // pred_fallthru
      _
    // Predicated region
    $region42: #{tpu_custom_call.1} parent=1 // pred_check
      _
    $region43: #{tpu_custom_call.1} parent=1 // pred_check_branch
      %38 = sbr.rel (0) target = $region45
    $region44: #{tpu_custom_call.1} parent=1 // pred_region
      _
    $region45: #{tpu_custom_call.1} parent=1 // pred_fallthru
      _
    %v39 = vld [vmem:[%s0] sm:$0xff]
    %v40 = vld [vmem:[%s0 + $0x8] sm:$0xff]
    %v41 = vld [vmem:[%s0 + $0x10] sm:$0xff]
    %v42 = vld [vmem:[%s0 + $0x18] sm:$0xff]
    %vm43 = vcmask 31744
    %v44 = vsel %vm43, %v39, 0.0
    %45 = vadd.xlane.f32.xlu0 %v44
    %v46 = vpop.xlane.xlu0 %45
    %v47 = vsel %vm43, %v40, 0.0
    %48 = vadd.xlane.f32.xlu0 %v47
    %v49 = vpop.xlane.xlu0 %48
    %v50 = vsel %vm43, %v41, 0.0
    %51 = vadd.xlane.f32.xlu0 %v50
    %v52 = vpop.xlane.xlu0 %51
    %v53 = vsel %vm43, %v42, 0.0
    %54 = vadd.xlane.f32.xlu0 %v53
    %v55 = vpop.xlane.xlu0 %54
    %v56 = vrcp.pop 4.0
    %v57 = vmul.f32 %v46, %v56
    %v58 = vmul.f32 %v49, %v56
    %v59 = vmul.f32 %v52, %v56
    %v60 = vmul.f32 %v55, %v56
    %v61 = vsub.f32 %v39, %v57
    %v62 = vsub.f32 %v40, %v58
    %v63 = vsub.f32 %v41, %v59
    %v64 = vsub.f32 %v42, %v60
    %v65 = vmul.f32 %v61, %v61
    %v66 = vmul.f32 %v62, %v62
    %v67 = vmul.f32 %v63, %v63
    %v68 = vmul.f32 %v64, %v64
    %v69 = vsel %vm43, %v65, 0.0
    %70 = vadd.xlane.f32.xlu0 %v69
    %v71 = vpop.xlane.xlu0 %70
    %v72 = vsel %vm43, %v66, 0.0
    %73 = vadd.xlane.f32.xlu0 %v72
    %v74 = vpop.xlane.xlu0 %73
    %v75 = vsel %vm43, %v67, 0.0
    %76 = vadd.xlane.f32.xlu0 %v75
    %v77 = vpop.xlane.xlu0 %76
    %v78 = vsel %vm43, %v68, 0.0
    %79 = vadd.xlane.f32.xlu0 %v78
    %v80 = vpop.xlane.xlu0 %79
    %v81 = vmul.f32 %v71, %v56
    %v82 = vmul.f32 %v74, %v56
    %v83 = vmul.f32 %v77, %v56
    %v84 = vmul.f32 %v80, %v56
    %v85 = vadd.f32 %v81, 1e-05
    %v86 = vadd.f32 %v82, 1e-05
    %v87 = vadd.f32 %v83, 1e-05
    %v88 = vadd.f32 %v84, 1e-05
    %v89 = vrsqrt.pop %v85
    %v90 = vrsqrt.pop %v86
    %v91 = vrsqrt.pop %v87
    %v92 = vrsqrt.pop %v88
    %v93 = vmul.f32 %v61, %v89
    %v94 = vmul.f32 %v62, %v90
    %v95 = vmul.f32 %v63, %v91
    %v96 = vmul.f32 %v64, %v92
    %v97 = vld [vmem:[%s1] sm:$0xff]
    %v98 = vld [vmem:[%s1 + $0x8] sm:$0xff]
    %v99 = vld [vmem:[%s1 + $0x10] sm:$0xff]
    %v100 = vld [vmem:[%s1 + $0x18] sm:$0xff]
    %v101 = vld [vmem:[%s2] sm:$0xff]
    %v102 = vld [vmem:[%s2 + $0x8] sm:$0xff]
    %v103 = vld [vmem:[%s2 + $0x10] sm:$0xff]
    %v104 = vld [vmem:[%s2 + $0x18] sm:$0xff]
    %v105 = vrot.slane %v93, 7
    %v106 = vrot.slane %v94, 7
    %v107 = vrot.slane %v95, 7
    %v108 = vrot.slane %v96, 7
    %v109 = vlaneseq
    %v110 = vshrl.u32 %v109, 7
    %vm111 = vcmp.lt.s32.totalorder %v110, 1
    %v112 = vsel %vm111, %v107, %v108
    %v113 = vsel %vm111, %v106, %v107
    %v114 = vsel %vm111, %v105, %v106
    %v115 = vsel %vm111, %v108, %v105
    %117 = vset.pattern.permute.xlu0 0
    %118 = vperm.xlu0 %117, %v97
    %v119 = vpop.permute.xlu0 %118
    %122 = vset.pattern.permute.xlu0 0
    %123 = vperm.xlu0 %122, %v98
    %v124 = vpop.permute.xlu0 %123
    %127 = vset.pattern.permute.xlu0 0
    %128 = vperm.xlu0 %127, %v99
    %v129 = vpop.permute.xlu0 %128
    %132 = vset.pattern.permute.xlu0 0
    %133 = vperm.xlu0 %132, %v100
    %v134 = vpop.permute.xlu0 %133
    %v136 = vmul.f32 %v115, %v119
    %v137 = vmul.f32 %v114, %v124
    %v138 = vmul.f32 %v113, %v129
    %v139 = vmul.f32 %v112, %v134
    %v140 = vrot.slane %v93, 1
    %v141 = vrot.slane %v94, 1
    %v142 = vrot.slane %v95, 1
    %v143 = vrot.slane %v96, 1
    %vm144 = vcmp.lt.s32.totalorder %v110, 7
    %v145 = vsel %vm144, %v142, %v143
    %v146 = vsel %vm144, %v141, %v142
    %v147 = vsel %vm144, %v140, %v141
    %v148 = vsel %vm144, %v143, %v140
    %150 = vset.pattern.permute.xlu0 0
    %151 = vperm.xlu0 %150, %v101
    %v152 = vpop.permute.xlu0 %151
    %155 = vset.pattern.permute.xlu0 0
    %156 = vperm.xlu0 %155, %v102
    %v157 = vpop.permute.xlu0 %156
    %160 = vset.pattern.permute.xlu0 0
    %161 = vperm.xlu0 %160, %v103
    %v162 = vpop.permute.xlu0 %161
    %165 = vset.pattern.permute.xlu0 0
    %166 = vperm.xlu0 %165, %v104
    %v167 = vpop.permute.xlu0 %166
    %v169 = vmul.f32 %v147, %v152
    %v170 = vmul.f32 %v146, %v157
    %v171 = vmul.f32 %v145, %v162
    %v172 = vmul.f32 %v148, %v167
    %v173 = vld [vmem:[%s3] sm:$0xf]
    %v174 = vld [vmem:[%s4] sm:$0xf]
    %v176 = vsel %vm43, %v93, 0
    %v179 = vsel %vm43, %v94, 0
    %v182 = vsel %vm43, %v95, 0
    %v185 = vsel %vm43, %v96, 0
    %vm187 = vcmask 1043456
    %v189 = vsel %vm187, %v174, 0
    %191 = vmatprep.subr.mxu0 0.0
    %192 = vmatpush1.msra.mxu0 0.0
    %193 = vmatprep.subr.mxu0 0.0
    %194 = vmatpush1.msra.mxu0 0.0
    %195 = vmatprep.subr.mxu0 0.0
    %196 = vmatpush1.msra.mxu0 0.0
    %197 = vmatprep.subr.mxu0 0.0
    %198 = vmatpush1.msra.mxu0 0.0
    %199 = vmatprep.subr.mxu0 0.0
    %200 = vmatpush1.msra.mxu0 0.0
    %201 = vmatprep.subr.mxu0 0.0
    %202 = vmatpush1.msra.mxu0 0.0
    %203 = vmatprep.subr.mxu0 0.0
    %204 = vmatpush1.msra.mxu0 0.0
    %205 = vmatprep.subr.mxu0 0.0
    %206 = vmatpush1.msra.mxu0 0.0
    %207 = vmatprep.subr.mxu0 0.0
    %208 = vmatpush1.msra.mxu0 0.0
    %209 = vmatprep.subr.mxu0 0.0
    %210 = vmatpush1.msra.mxu0 0.0
    %211 = vmatprep.subr.mxu0 0.0
    %212 = vmatpush1.msra.mxu0 0.0
    %213 = vmatprep.subr.mxu0 0.0
    %214 = vmatpush1.msra.mxu0 0.0
    %215 = vmatprep.subr.mxu0 0.0
    %216 = vmatpush1.msra.mxu0 0.0
    %217 = vmatprep.subr.mxu0 0.0
    %218 = vmatpush1.msra.mxu0 0.0
    %219 = vmatprep.subr.mxu0 0.0
    %220 = vmatpush1.msra.mxu0 0.0
    %221 = vmatprep.subr.mxu0 0.0
    %222 = vmatpush1.msra.mxu0 %v189
    %223 = vmatprep.subr.mxu0 0.0
    %224 = vmatpush2.msra.mxu0 0.0
    %225 = vmatprep.subr.mxu0 0.0
    %226 = vmatpush2.msra.mxu0 0.0
    %227 = vmatprep.subr.mxu0 0.0
    %228 = vmatpush2.msra.mxu0 0.0
    %229 = vmatprep.subr.mxu0 0.0
    %230 = vmatpush2.msra.mxu0 0.0
    %231 = vmatprep.subr.mxu0 0.0
    %232 = vmatpush2.msra.mxu0 0.0
    %233 = vmatprep.subr.mxu0 0.0
    %234 = vmatpush2.msra.mxu0 0.0
    %235 = vmatprep.subr.mxu0 0.0
    %236 = vmatpush2.msra.mxu0 0.0
    %237 = vmatprep.subr.mxu0 0.0
    %238 = vmatpush2.msra.mxu0 0.0
    %239 = vmatprep.subr.mxu0 0.0
    %240 = vmatpush2.msra.mxu0 0.0
    %241 = vmatprep.subr.mxu0 0.0
    %242 = vmatpush2.msra.mxu0 0.0
    %243 = vmatprep.subr.mxu0 0.0
    %244 = vmatpush2.msra.mxu0 0.0
    %245 = vmatprep.subr.mxu0 0.0
    %246 = vmatpush2.msra.mxu0 0.0
    %247 = vmatprep.subr.mxu0 0.0
    %248 = vmatpush2.msra.mxu0 0.0
    %249 = vmatprep.subr.mxu0 0.0
    %250 = vmatpush2.msra.mxu0 0.0
    %251 = vmatprep.subr.mxu0 0.0
    %252 = vmatpush2.msra.mxu0 0.0
    %253 = vmatprep.subr.mxu0 0.0
    %254 = vmatpush2.msra.mxu0 0.0
    %255 = vmatprep.mubr.f32.mxu0 0.0
    %256 = vmatmul.mubr.f32.gmra.mxu0 %v176
    %v257 = vpop.f32.mrf.mxu0
    %v258 = vadd.f32 0.0, %v257
    %v259 = vpop.f32.mrf.mxu0
    %260 = vmatprep.mubr.f32.mxu0 0.0
    %261 = vmatmul.mubr.f32.gmra.mxu0 %v179
    %v262 = vpop.f32.mrf.mxu0
    %v263 = vadd.f32 0.0, %v262
    %v264 = vpop.f32.mrf.mxu0
    %265 = vmatprep.mubr.f32.mxu0 0.0
    %266 = vmatmul.mubr.f32.gmra.mxu0 %v182
    %v267 = vpop.f32.mrf.mxu0
    %v268 = vadd.f32 0.0, %v267
    %v269 = vpop.f32.mrf.mxu0
    %270 = vmatprep.mubr.f32.mxu0 0.0
    %271 = vmatmul.mubr.f32.gmra.mxu0 %v185
    %v272 = vpop.f32.mrf.mxu0
    %v273 = vadd.f32 0.0, %v272
    %v274 = vpop.f32.mrf.mxu0
    %275 = vdwg.mxu0
    %v277 = vsel %vm43, %v136, 0
    %v280 = vsel %vm43, %v137, 0
    %v283 = vsel %vm43, %v138, 0
    %v286 = vsel %vm43, %v139, 0
    %v289 = vsel %vm187, %v173, 0
    %291 = vmatprep.subr.mxu0 0.0
    %292 = vmatpush1.msra.mxu0 0.0
    %293 = vmatprep.subr.mxu0 0.0
    %294 = vmatpush1.msra.mxu0 0.0
    %295 = vmatprep.subr.mxu0 0.0
    %296 = vmatpush1.msra.mxu0 0.0
    %297 = vmatprep.subr.mxu0 0.0
    %298 = vmatpush1.msra.mxu0 0.0
    %299 = vmatprep.subr.mxu0 0.0
    %300 = vmatpush1.msra.mxu0 0.0
    %301 = vmatprep.subr.mxu0 0.0
    %302 = vmatpush1.msra.mxu0 0.0
    %303 = vmatprep.subr.mxu0 0.0
    %304 = vmatpush1.msra.mxu0 0.0
    %305 = vmatprep.subr.mxu0 0.0
    %306 = vmatpush1.msra.mxu0 0.0
    %307 = vmatprep.subr.mxu0 0.0
    %308 = vmatpush1.msra.mxu0 0.0
    %309 = vmatprep.subr.mxu0 0.0
    %310 = vmatpush1.msra.mxu0 0.0
    %311 = vmatprep.subr.mxu0 0.0
    %312 = vmatpush1.msra.mxu0 0.0
    %313 = vmatprep.subr.mxu0 0.0
    %314 = vmatpush1.msra.mxu0 0.0
    %315 = vmatprep.subr.mxu0 0.0
    %316 = vmatpush1.msra.mxu0 0.0
    %317 = vmatprep.subr.mxu0 0.0
    %318 = vmatpush1.msra.mxu0 0.0
    %319 = vmatprep.subr.mxu0 0.0
    %320 = vmatpush1.msra.mxu0 0.0
    %321 = vmatprep.subr.mxu0 0.0
    %322 = vmatpush1.msra.mxu0 %v289
    %323 = vmatprep.subr.mxu0 0.0
    %324 = vmatpush2.msra.mxu0 0.0
    %325 = vmatprep.subr.mxu0 0.0
    %326 = vmatpush2.msra.mxu0 0.0
    %327 = vmatprep.subr.mxu0 0.0
    %328 = vmatpush2.msra.mxu0 0.0
    %329 = vmatprep.subr.mxu0 0.0
    %330 = vmatpush2.msra.mxu0 0.0
    %331 = vmatprep.subr.mxu0 0.0
    %332 = vmatpush2.msra.mxu0 0.0
    %333 = vmatprep.subr.mxu0 0.0
    %334 = vmatpush2.msra.mxu0 0.0
    %335 = vmatprep.subr.mxu0 0.0
    %336 = vmatpush2.msra.mxu0 0.0
    %337 = vmatprep.subr.mxu0 0.0
    %338 = vmatpush2.msra.mxu0 0.0
    %339 = vmatprep.subr.mxu0 0.0
    %340 = vmatpush2.msra.mxu0 0.0
    %341 = vmatprep.subr.mxu0 0.0
    %342 = vmatpush2.msra.mxu0 0.0
    %343 = vmatprep.subr.mxu0 0.0
    %344 = vmatpush2.msra.mxu0 0.0
    %345 = vmatprep.subr.mxu0 0.0
    %346 = vmatpush2.msra.mxu0 0.0
    %347 = vmatprep.subr.mxu0 0.0
    %348 = vmatpush2.msra.mxu0 0.0
    %349 = vmatprep.subr.mxu0 0.0
    %350 = vmatpush2.msra.mxu0 0.0
    %351 = vmatprep.subr.mxu0 0.0
    %352 = vmatpush2.msra.mxu0 0.0
    %353 = vmatprep.subr.mxu0 0.0
    %354 = vmatpush2.msra.mxu0 0.0
    %355 = vmatprep.mubr.f32.mxu0 0.0
    %356 = vmatmul.mubr.f32.gmra.mxu0 %v277
    %v357 = vpop.f32.mrf.mxu0
    %v358 = vadd.f32 %v258, %v357
    %v359 = vpop.f32.mrf.mxu0
    %360 = vmatprep.mubr.f32.mxu0 0.0
    %361 = vmatmul.mubr.f32.gmra.mxu0 %v280
    %v362 = vpop.f32.mrf.mxu0
    %v363 = vadd.f32 %v263, %v362
    %v364 = vpop.f32.mrf.mxu0
    %365 = vmatprep.mubr.f32.mxu0 0.0
    %366 = vmatmul.mubr.f32.gmra.mxu0 %v283
    %v367 = vpop.f32.mrf.mxu0
    %v368 = vadd.f32 %v268, %v367
    %v369 = vpop.f32.mrf.mxu0
    %370 = vmatprep.mubr.f32.mxu0 0.0
    %371 = vmatmul.mubr.f32.gmra.mxu0 %v286
    %v372 = vpop.f32.mrf.mxu0
    %v373 = vadd.f32 %v273, %v372
    %v374 = vpop.f32.mrf.mxu0
    %375 = vdwg.mxu0
    %v376 = vld [vmem:[%s5] sm:$0xf]
    %v378 = vsel %vm43, %v169, 0
    %v381 = vsel %vm43, %v170, 0
    %v384 = vsel %vm43, %v171, 0
    %v387 = vsel %vm43, %v172, 0
    %v390 = vsel %vm187, %v376, 0
    %392 = vmatprep.subr.mxu0 0.0
    %393 = vmatpush1.msra.mxu0 0.0
    %394 = vmatprep.subr.mxu0 0.0
    %395 = vmatpush1.msra.mxu0 0.0
    %396 = vmatprep.subr.mxu0 0.0
    %397 = vmatpush1.msra.mxu0 0.0
    %398 = vmatprep.subr.mxu0 0.0
    %399 = vmatpush1.msra.mxu0 0.0
    %400 = vmatprep.subr.mxu0 0.0
    %401 = vmatpush1.msra.mxu0 0.0
    %402 = vmatprep.subr.mxu0 0.0
    %403 = vmatpush1.msra.mxu0 0.0
    %404 = vmatprep.subr.mxu0 0.0
    %405 = vmatpush1.msra.mxu0 0.0
    %406 = vmatprep.subr.mxu0 0.0
    %407 = vmatpush1.msra.mxu0 0.0
    %408 = vmatprep.subr.mxu0 0.0
    %409 = vmatpush1.msra.mxu0 0.0
    %410 = vmatprep.subr.mxu0 0.0
    %411 = vmatpush1.msra.mxu0 0.0
    %412 = vmatprep.subr.mxu0 0.0
    %413 = vmatpush1.msra.mxu0 0.0
    %414 = vmatprep.subr.mxu0 0.0
    %415 = vmatpush1.msra.mxu0 0.0
    %416 = vmatprep.subr.mxu0 0.0
    %417 = vmatpush1.msra.mxu0 0.0
    %418 = vmatprep.subr.mxu0 0.0
    %419 = vmatpush1.msra.mxu0 0.0
    %420 = vmatprep.subr.mxu0 0.0
    %421 = vmatpush1.msra.mxu0 0.0
    %422 = vmatprep.subr.mxu0 0.0
    %423 = vmatpush1.msra.mxu0 %v390
    %424 = vmatprep.subr.mxu0 0.0
    %425 = vmatpush2.msra.mxu0 0.0
    %426 = vmatprep.subr.mxu0 0.0
    %427 = vmatpush2.msra.mxu0 0.0
    %428 = vmatprep.subr.mxu0 0.0
    %429 = vmatpush2.msra.mxu0 0.0
    %430 = vmatprep.subr.mxu0 0.0
    %431 = vmatpush2.msra.mxu0 0.0
    %432 = vmatprep.subr.mxu0 0.0
    %433 = vmatpush2.msra.mxu0 0.0
    %434 = vmatprep.subr.mxu0 0.0
    %435 = vmatpush2.msra.mxu0 0.0
    %436 = vmatprep.subr.mxu0 0.0
    %437 = vmatpush2.msra.mxu0 0.0
    %438 = vmatprep.subr.mxu0 0.0
    %439 = vmatpush2.msra.mxu0 0.0
    %440 = vmatprep.subr.mxu0 0.0
    %441 = vmatpush2.msra.mxu0 0.0
    %442 = vmatprep.subr.mxu0 0.0
    %443 = vmatpush2.msra.mxu0 0.0
    %444 = vmatprep.subr.mxu0 0.0
    %445 = vmatpush2.msra.mxu0 0.0
    %446 = vmatprep.subr.mxu0 0.0
    %447 = vmatpush2.msra.mxu0 0.0
    %448 = vmatprep.subr.mxu0 0.0
    %449 = vmatpush2.msra.mxu0 0.0
    %450 = vmatprep.subr.mxu0 0.0
    %451 = vmatpush2.msra.mxu0 0.0
    %452 = vmatprep.subr.mxu0 0.0
    %453 = vmatpush2.msra.mxu0 0.0
    %454 = vmatprep.subr.mxu0 0.0
    %455 = vmatpush2.msra.mxu0 0.0
    %456 = vmatprep.mubr.f32.mxu0 0.0
    %457 = vmatmul.mubr.f32.gmra.mxu0 %v378
    %v458 = vpop.f32.mrf.mxu0
    %v459 = vadd.f32 0.0, %v458
    %v460 = vpop.f32.mrf.mxu0
    %461 = vmatprep.mubr.f32.mxu0 0.0
    %462 = vmatmul.mubr.f32.gmra.mxu0 %v381
    %v463 = vpop.f32.mrf.mxu0
    %v464 = vadd.f32 0.0, %v463
    %v465 = vpop.f32.mrf.mxu0
    %466 = vmatprep.mubr.f32.mxu0 0.0
    %467 = vmatmul.mubr.f32.gmra.mxu0 %v384
    %v468 = vpop.f32.mrf.mxu0
    %v469 = vadd.f32 0.0, %v468
    %v470 = vpop.f32.mrf.mxu0
    %471 = vmatprep.mubr.f32.mxu0 0.0
    %472 = vmatmul.mubr.f32.gmra.mxu0 %v387
    %v473 = vpop.f32.mrf.mxu0
    %v474 = vadd.f32 0.0, %v473
    %v475 = vpop.f32.mrf.mxu0
    %476 = vdwg.mxu0
    %v477 = vadd.f32 %v358, %v459
    %v478 = vadd.f32 %v363, %v464
    %v479 = vadd.f32 %v368, %v469
    %v480 = vadd.f32 %v373, %v474
    %v481 = vld [vmem:[%s6] sm:$0x1]
    %v483 = vlaneseq
    %v484 = vshrl.u32 %v483, 7
    %v485 = vsub.s32 0, %v484
    %v486 = vrot.slane %v481, %v485
    %v488 = vadd.f32 %v477, %v486
    %v489 = vadd.f32 %v478, %v486
    %v490 = vadd.f32 %v479, %v486
    %v491 = vadd.f32 %v480, %v486
    %v492 = vmax.f32 %v488, 0.0
    %v493 = vmax.f32 %v489, 0.0
    %v494 = vmax.f32 %v490, 0.0
    %v495 = vmax.f32 %v491, 0.0
    %v496 = vrot.slane %v492, 7
    %v497 = vrot.slane %v493, 7
    %v498 = vrot.slane %v494, 7
    %v499 = vrot.slane %v495, 7
    %v500 = vsel %vm111, %v498, %v499
    %v501 = vsel %vm111, %v497, %v498
    %v502 = vsel %vm111, %v496, %v497
    %v503 = vsel %vm111, %v499, %v496
    %v504 = vmul.f32 %v503, %v119
    %v505 = vmul.f32 %v502, %v124
    %v506 = vmul.f32 %v501, %v129
    %v507 = vmul.f32 %v500, %v134
    %v508 = vrot.slane %v492, 1
    %v509 = vrot.slane %v493, 1
    %v510 = vrot.slane %v494, 1
    %v511 = vrot.slane %v495, 1
    %v512 = vsel %vm144, %v510, %v511
    %v513 = vsel %vm144, %v509, %v510
    %v514 = vsel %vm144, %v508, %v509
    %v515 = vsel %vm144, %v511, %v508
    %v516 = vmul.f32 %v514, %v152
    %v517 = vmul.f32 %v513, %v157
    %v518 = vmul.f32 %v512, %v162
    %v519 = vmul.f32 %v515, %v167
    %524 = vrot.lane.b32.xlu0 %v492, 32
    %v525 = vpop.permute.xlu0 %524
    %526 = vrot.lane.b32.xlu0 %v493, 32
    %v527 = vpop.permute.xlu0 %526
    %528 = vrot.lane.b32.xlu0 %v494, 32
    %v529 = vpop.permute.xlu0 %528
    %530 = vrot.lane.b32.xlu0 %v495, 32
    %v531 = vpop.permute.xlu0 %530
    %540 = vrot.lane.b32.xlu0 %v516, 64
    %v541 = vpop.permute.xlu0 %540
    %542 = vrot.lane.b32.xlu0 %v517, 64
    %v543 = vpop.permute.xlu0 %542
    %544 = vrot.lane.b32.xlu0 %v518, 64
    %v545 = vpop.permute.xlu0 %544
    %546 = vrot.lane.b32.xlu0 %v519, 64
    %v547 = vpop.permute.xlu0 %546
    %vm552 = vcmask 261120
    %v553 = vsel %vm552, %v504, %v525
    %v554 = vsel %vm552, %v505, %v527
    %v555 = vsel %vm552, %v506, %v529
    %v556 = vsel %vm552, %v507, %v531
    %vm557 = vcmask 523264
    %v558 = vsel %vm557, %v553, %v541
    %v559 = vsel %vm557, %v554, %v543
    %v560 = vsel %vm557, %v555, %v545
    %v561 = vsel %vm557, %v556, %v547
    %v562 = vld [vmem:[%s7] sm:$0xff]
    %v563 = vld [vmem:[%s7 + $0x8] sm:$0xff]
    %v564 = vld [vmem:[%s7 + $0x10] sm:$0xff]
    %v565 = vld [vmem:[%s7 + $0x18] sm:$0xff]
    %v566 = vld [vmem:[%s7 + $0x20] sm:$0xff]
    %v567 = vld [vmem:[%s7 + $0x28] sm:$0xff]
    %v568 = vld [vmem:[%s7 + $0x30] sm:$0xff]
    %v569 = vld [vmem:[%s7 + $0x38] sm:$0xff]
    %v570 = vld [vmem:[%s7 + $0x40] sm:$0xff]
    %v571 = vld [vmem:[%s7 + $0x48] sm:$0xff]
    %v572 = vld [vmem:[%s7 + $0x50] sm:$0xff]
    %v573 = vld [vmem:[%s7 + $0x58] sm:$0xff]
    %v574 = vld [vmem:[%s8] sm:$0x1]
    %v576 = vlaneseq
    %v577 = vshrl.u32 %v576, 7
    %v578 = vsub.s32 0, %v577
    %v579 = vrot.slane %v574, %v578
    %vm581 = vcmask 785408
    %v583 = vsel %vm581, %v558, 0
    %v586 = vsel %vm581, %v559, 0
    %v589 = vsel %vm581, %v560, 0
    %v592 = vsel %vm581, %v561, 0
    %594 = vmatprep.subr.mxu0 0.0
    %595 = vmatpush1.msra.mxu0 0.0
    %596 = vmatprep.subr.mxu0 0.0
    %597 = vmatpush1.msra.mxu0 0.0
    %598 = vmatprep.subr.mxu0 0.0
    %599 = vmatpush1.msra.mxu0 0.0
    %600 = vmatprep.subr.mxu0 0.0
    %601 = vmatpush1.msra.mxu0 0.0
    %602 = vmatprep.subr.mxu0 0.0
    %603 = vmatpush1.msra.mxu0 %v573
    %604 = vmatprep.subr.mxu0 0.0
    %605 = vmatpush1.msra.mxu0 %v572
    %606 = vmatprep.subr.mxu0 0.0
    %607 = vmatpush1.msra.mxu0 %v571
    %608 = vmatprep.subr.mxu0 0.0
    %609 = vmatpush1.msra.mxu0 %v570
    %610 = vmatprep.subr.mxu0 0.0
    %611 = vmatpush1.msra.mxu0 %v569
    %612 = vmatprep.subr.mxu0 0.0
    %613 = vmatpush1.msra.mxu0 %v568
    %614 = vmatprep.subr.mxu0 0.0
    %615 = vmatpush1.msra.mxu0 %v567
    %616 = vmatprep.subr.mxu0 0.0
    %617 = vmatpush1.msra.mxu0 %v566
    %618 = vmatprep.subr.mxu0 0.0
    %619 = vmatpush1.msra.mxu0 %v565
    %620 = vmatprep.subr.mxu0 0.0
    %621 = vmatpush1.msra.mxu0 %v564
    %622 = vmatprep.subr.mxu0 0.0
    %623 = vmatpush1.msra.mxu0 %v563
    %624 = vmatprep.subr.mxu0 0.0
    %625 = vmatpush1.msra.mxu0 %v562
    %626 = vmatprep.subr.mxu0 0.0
    %627 = vmatpush2.msra.mxu0 0.0
    %628 = vmatprep.subr.mxu0 0.0
    %629 = vmatpush2.msra.mxu0 0.0
    %630 = vmatprep.subr.mxu0 0.0
    %631 = vmatpush2.msra.mxu0 0.0
    %632 = vmatprep.subr.mxu0 0.0
    %633 = vmatpush2.msra.mxu0 0.0
    %634 = vmatprep.subr.mxu0 0.0
    %635 = vmatpush2.msra.mxu0 0.0
    %636 = vmatprep.subr.mxu0 0.0
    %637 = vmatpush2.msra.mxu0 0.0
    %638 = vmatprep.subr.mxu0 0.0
    %639 = vmatpush2.msra.mxu0 0.0
    %640 = vmatprep.subr.mxu0 0.0
    %641 = vmatpush2.msra.mxu0 0.0
    %642 = vmatprep.subr.mxu0 0.0
    %643 = vmatpush2.msra.mxu0 0.0
    %644 = vmatprep.subr.mxu0 0.0
    %645 = vmatpush2.msra.mxu0 0.0
    %646 = vmatprep.subr.mxu0 0.0
    %647 = vmatpush2.msra.mxu0 0.0
    %648 = vmatprep.subr.mxu0 0.0
    %649 = vmatpush2.msra.mxu0 0.0
    %650 = vmatprep.subr.mxu0 0.0
    %651 = vmatpush2.msra.mxu0 0.0
    %652 = vmatprep.subr.mxu0 0.0
    %653 = vmatpush2.msra.mxu0 0.0
    %654 = vmatprep.subr.mxu0 0.0
    %655 = vmatpush2.msra.mxu0 0.0
    %656 = vmatprep.subr.mxu0 0.0
    %657 = vmatpush2.msra.mxu0 0.0
    %658 = vmatprep.mubr.f32.mxu0 0.0
    %659 = vmatmul.mubr.f32.gmra.mxu0 %v583
    %v660 = vpop.f32.mrf.mxu0
    %v661 = vadd.f32 %v579, %v660
    %v662 = vpop.f32.mrf.mxu0
    %663 = vmatprep.mubr.f32.mxu0 0.0
    %664 = vmatmul.mubr.f32.gmra.mxu0 %v586
    %v665 = vpop.f32.mrf.mxu0
    %v666 = vadd.f32 %v579, %v665
    %v667 = vpop.f32.mrf.mxu0
    %668 = vmatprep.mubr.f32.mxu0 0.0
    %669 = vmatmul.mubr.f32.gmra.mxu0 %v589
    %v670 = vpop.f32.mrf.mxu0
    %v671 = vadd.f32 %v579, %v670
    %v672 = vpop.f32.mrf.mxu0
    %673 = vmatprep.mubr.f32.mxu0 0.0
    %674 = vmatmul.mubr.f32.gmra.mxu0 %v592
    %v675 = vpop.f32.mrf.mxu0
    %v676 = vadd.f32 %v579, %v675
    %v677 = vpop.f32.mrf.mxu0
    %678 = vdwg.mxu0
    %v679 = vmax.f32 %v661, 0.0
    %v680 = vmax.f32 %v666, 0.0
    %v681 = vmax.f32 %v671, 0.0
    %v682 = vmax.f32 %v676, 0.0
    %v683 = vsel %vm552, %v679, 0.0
    %v684 = vsel %vm552, %v680, 0.0
    %v685 = vadd.f32 %v683, %v684
    %v686 = vrot.slane %v685, 4
    %v687 = vadd.f32 %v685, %v686
    %v688 = vrot.slane %v687, 2
    %v689 = vadd.f32 %v687, %v688
    %v690 = vrot.slane %v689, 1
    %v691 = vadd.f32 %v689, %v690
    %v692 = vsel %vm552, %v681, 0.0
    %v693 = vsel %vm552, %v682, 0.0
    %v694 = vadd.f32 %v692, %v693
    %v695 = vrot.slane %v694, 4
    %v696 = vadd.f32 %v694, %v695
    %v697 = vrot.slane %v696, 2
    %v698 = vadd.f32 %v696, %v697
    %v699 = vrot.slane %v698, 1
    %v700 = vadd.f32 %v698, %v699
    %v701 = vld [vmem:[%s9] sm:$0xff]
    %v702 = vld [vmem:[%s9 + $0x8] sm:$0xff]
    %v703 = vld [vmem:[%s9 + $0x10] sm:$0xff]
    %v704 = vld [vmem:[%s9 + $0x18] sm:$0xff]
    %v705 = vld [vmem:[%s10] sm:$0x1]
    %v707 = vlaneseq
    %v708 = vshrl.u32 %v707, 7
    %v709 = vsub.s32 0, %v708
    %v710 = vrot.slane %v705, %v709
    %vm714 = vcmask 1041409
    %v715 = vsel %vm714, %v700, %v691
    %v716 = vsel %vm552, %v715, 0
    %718 = vmatprep.subr.mxu0 0.0
    %719 = vmatpush1.msra.mxu0 0.0
    %720 = vmatprep.subr.mxu0 0.0
    %721 = vmatpush1.msra.mxu0 0.0
    %722 = vmatprep.subr.mxu0 0.0
    %723 = vmatpush1.msra.mxu0 0.0
    %724 = vmatprep.subr.mxu0 0.0
    %725 = vmatpush1.msra.mxu0 0.0
    %726 = vmatprep.subr.mxu0 0.0
    %727 = vmatpush1.msra.mxu0 0.0
    %728 = vmatprep.subr.mxu0 0.0
    %729 = vmatpush1.msra.mxu0 0.0
    %730 = vmatprep.subr.mxu0 0.0
    %731 = vmatpush1.msra.mxu0 0.0
    %732 = vmatprep.subr.mxu0 0.0
    %733 = vmatpush1.msra.mxu0 0.0
    %734 = vmatprep.subr.mxu0 0.0
    %735 = vmatpush1.msra.mxu0 0.0
    %736 = vmatprep.subr.mxu0 0.0
    %737 = vmatpush1.msra.mxu0 0.0
    %738 = vmatprep.subr.mxu0 0.0
    %739 = vmatpush1.msra.mxu0 0.0
    %740 = vmatprep.subr.mxu0 0.0
    %741 = vmatpush1.msra.mxu0 0.0
    %742 = vmatprep.subr.mxu0 0.0
    %743 = vmatpush1.msra.mxu0 %v704
    %744 = vmatprep.subr.mxu0 0.0
    %745 = vmatpush1.msra.mxu0 %v703
    %746 = vmatprep.subr.mxu0 0.0
    %747 = vmatpush1.msra.mxu0 %v702
    %748 = vmatprep.subr.mxu0 0.0
    %749 = vmatpush1.msra.mxu0 %v701
    %750 = vmatprep.subr.mxu0 0.0
    %751 = vmatpush2.msra.mxu0 0.0
    %752 = vmatprep.subr.mxu0 0.0
    %753 = vmatpush2.msra.mxu0 0.0
    %754 = vmatprep.subr.mxu0 0.0
    %755 = vmatpush2.msra.mxu0 0.0
    %756 = vmatprep.subr.mxu0 0.0
    %757 = vmatpush2.msra.mxu0 0.0
    %758 = vmatprep.subr.mxu0 0.0
    %759 = vmatpush2.msra.mxu0 0.0
    %760 = vmatprep.subr.mxu0 0.0
    %761 = vmatpush2.msra.mxu0 0.0
    %762 = vmatprep.subr.mxu0 0.0
    %763 = vmatpush2.msra.mxu0 0.0
    %764 = vmatprep.subr.mxu0 0.0
    %765 = vmatpush2.msra.mxu0 0.0
    %766 = vmatprep.subr.mxu0 0.0
    %767 = vmatpush2.msra.mxu0 0.0
    %768 = vmatprep.subr.mxu0 0.0
    %769 = vmatpush2.msra.mxu0 0.0
    %770 = vmatprep.subr.mxu0 0.0
    %771 = vmatpush2.msra.mxu0 0.0
    %772 = vmatprep.subr.mxu0 0.0
    %773 = vmatpush2.msra.mxu0 0.0
    %774 = vmatprep.subr.mxu0 0.0
    %775 = vmatpush2.msra.mxu0 0.0
    %776 = vmatprep.subr.mxu0 0.0
    %777 = vmatpush2.msra.mxu0 0.0
    %778 = vmatprep.subr.mxu0 0.0
    %779 = vmatpush2.msra.mxu0 0.0
    %780 = vmatprep.subr.mxu0 0.0
    %781 = vmatpush2.msra.mxu0 0.0
    %782 = vmatprep.mubr.f32.mxu0 0.0
    %783 = vmatmul.mubr.f32.gmra.mxu0 %v716
    %v784 = vpop.f32.mrf.mxu0
    %v785 = vadd.f32 %v710, %v784
    %v786 = vpop.f32.mrf.mxu0
    %787 = vdwg.mxu0
    %788 = vst [vmem:[#allocation2] sm:$0x3] %v785
    // Predicated region
    $region46: #{tpu_custom_call.1} parent=1 // pred_check
      _
    $region47: #{tpu_custom_call.1} parent=1 // pred_check_branch
      %790 = sbr.rel (0) target = $region49
    $region48: #{tpu_custom_call.1} parent=1 // pred_region
      %s792 = ssub.s32 32, 32
      %793 = vsyncadd [#allocation3], %s792
      %s795 = sshll.u32 [#allocation2], 4
      %s796 = int_to_ptr.vmem [resolvable:$true] %s795
      %798 = dma.vmem_to_hbm [thread:$0]  %s796, 32, %s11, [#allocation3]
    $region49: #{tpu_custom_call.1} parent=1 // pred_fallthru
      _
    // Predicated region
    $region50: #{tpu_custom_call.1} parent=1 // pred_check
      _
    $region51: #{tpu_custom_call.1} parent=1 // pred_check_branch
      %800 = sbr.rel (0) target = $region53
    $region52: #{tpu_custom_call.1} parent=1 // pred_region
      %801 = dma.done [#allocation3], 32
    $region53: #{tpu_custom_call.1} parent=1 // pred_fallthru
      _
    %802 = vsyncpa [#allocation3], 1

</llo_original>
